<compile_context>
chip_gen: v7x
topology: tpu7x:2x2x1
jax: 0.10.0
libtpu: 0.0.40
codegen_flags: <defaults>
</compile_context>

<pallas_src>
import jax
import jax.numpy as jnp
from jax.experimental import pallas as pl
from jax.experimental.pallas import tpu as pltpu

MEM_SIZE = 128                     # self.memSize
N_POS = 9                          # 27 // 3 positions after split+stack
N_FEAT = 3                         # per-position triple
STATE = N_POS * N_FEAT             # 27

SUBLANE = 8                        # f32 sublane tile
MAX_BLOCK_B = 512                  # states per block before switching to the grid path


def init_params(head, tail):
    """One-time algebraic fold of the weights (recompute after each weight update).

    y = xs @ (tail @ tail.T) + (x @ (head @ tail.T))[None, :]
    is folded into a single (27, 27) matrix W with
        W[3q+k, 3p+j] = (head @ tail.T)[3q+k, j] + (q == p) * (tail @ tail.T)[k, j]
    so the whole forward becomes y_flat = x @ W, y = y_flat.reshape(9, 3).
    """
    hp = jax.lax.Precision.HIGHEST
    head = head.astype(jnp.float32)
    tail = tail.astype(jnp.float32)
    A = jnp.dot(tail, tail.T, precision=hp)                      # (3, 3)
    Bh = jnp.dot(head, tail.T, precision=hp)                     # (27, 3)
    W = jnp.tile(Bh, (1, N_POS)) + jnp.kron(jnp.eye(N_POS, dtype=jnp.float32), A)
    return W                                                     # (27, 27)


def pg_forward_kernel(x_ref, w_ref, y_ref):
    # x_ref: (rows, 27)   w_ref: (27, 27)   y_ref: (rows, 27)
    y_ref[...] = jnp.dot(x_ref[...], w_ref[...],
                         preferred_element_type=jnp.float32)


@jax.jit
def policy_gradient_forward_batched(x_batch, W):
    """x_batch: (B, 27) f32 -> y: (B, 9, 3) f32."""
    x_batch = x_batch.astype(jnp.float32)
    B = x_batch.shape[0]

    if B <= MAX_BLOCK_B:
        # Single whole-VMEM call: no grid, no pipeline bookkeeping.
        b_pad = pl.cdiv(B, SUBLANE) * SUBLANE
        x_in = x_batch if b_pad == B else jnp.pad(x_batch, ((0, b_pad - B), (0, 0)))
        y_flat = pl.pallas_call(
            pg_forward_kernel,
            out_shape=jax.ShapeDtypeStruct((b_pad, STATE), jnp.float32),
            in_specs=[pl.BlockSpec(memory_space=pltpu.MemorySpace.VMEM)] * 2,
            out_specs=pl.BlockSpec(memory_space=pltpu.MemorySpace.VMEM),
        )(x_in, W)
    else:
        # Large batch: 1-D 'parallel' grid over balanced batch blocks.
        num_blocks = pl.cdiv(B, MAX_BLOCK_B)
        num_blocks += num_blocks % 2          # even block count -> balanced on v7x's 2 TCs
        block_b = pl.cdiv(pl.cdiv(B, num_blocks), SUBLANE) * SUBLANE
        b_pad = num_blocks * block_b
        x_in = x_batch if b_pad == B else jnp.pad(x_batch, ((0, b_pad - B), (0, 0)))
        y_flat = pl.pallas_call(
            pg_forward_kernel,
            out_shape=jax.ShapeDtypeStruct((b_pad, STATE), jnp.float32),
            grid=(num_blocks,),
            in_specs=[
                pl.BlockSpec((block_b, STATE), lambda i: (i, 0)),
                pl.BlockSpec((STATE, STATE), lambda i: (0, 0)),   # W stays VMEM-resident
            ],
            out_specs=pl.BlockSpec((block_b, STATE), lambda i: (i, 0)),
            compiler_params=pltpu.CompilerParams(
                dimension_semantics=("parallel",)),
        )(x_in, W)

    return y_flat[:B].reshape(B, N_POS, N_FEAT)


def policy_gradient_forward(x, W):
    """Single-state forward matching the PyTorch module: x (27,) -> y (9, 3)."""
    return policy_gradient_forward_batched(x[None, :], W)[0]


def policy_gradient_forward_ref(x, head, tail):
    """Plain-JAX high-precision reference of the same forward."""
    hp = jax.lax.Precision.HIGHEST
    xs = x.reshape(N_POS, N_FEAT)
    h = jnp.dot(x, head, precision=hp)                               # (128,)
    return jnp.dot(jnp.dot(xs, tail, precision=hp) + h[None, :],
                   tail.T, precision=hp)                             # (9, 3)


if __name__ == "__main__":
    key = jax.random.PRNGKey(0)
    k_head, k_tail, k_x1, k_x2, k_x3 = jax.random.split(key, 5)

    # Deterministic parameter init (mirrors randn((27, memSize)), randn((3, memSize)))
    head = jax.random.normal(k_head, (STATE, MEM_SIZE), dtype=jnp.float32)
    tail = jax.random.normal(k_tail, (N_FEAT, MEM_SIZE), dtype=jnp.float32)

    # One-time weight fold (hoisted out of the per-call forward).
    W = jax.block_until_ready(init_params(head, tail))
    assert W.shape == (STATE, STATE)

    ref_fn = jax.vmap(lambda xi: policy_gradient_forward_ref(xi, head, tail))

    # 1) Single-state path (as used by choose_action): one pallas_call launch.
    x = jax.random.normal(k_x1, (STATE,), dtype=jnp.float32)
    y = jax.block_until_ready(policy_gradient_forward(x, W))
    y_ref = policy_gradient_forward_ref(x, head, tail)
    assert y.shape == (N_POS, N_FEAT)
    assert jnp.allclose(y, y_ref, rtol=1e-4, atol=1e-3), "single-state mismatch"

    # 2) Small batch: single whole-VMEM call (no grid).
    B = 20
    xb = jax.random.normal(k_x2, (B, STATE), dtype=jnp.float32)
    yb = jax.block_until_ready(policy_gradient_forward_batched(xb, W))
    yb_ref = ref_fn(xb)
    assert yb.shape == (B, N_POS, N_FEAT)
    assert jnp.allclose(yb, yb_ref, rtol=1e-4, atol=1e-3), "small-batch mismatch"

    # 3) Large batch: exercises the 1-D 'parallel' grid with balanced blocks.
    B2 = 1100
    xc = jax.random.normal(k_x3, (B2, STATE), dtype=jnp.float32)
    yc = jax.block_until_ready(policy_gradient_forward_batched(xc, W))
    yc_ref = ref_fn(xc)
    assert yc.shape == (B2, N_POS, N_FEAT)
    assert jnp.allclose(yc, yc_ref, rtol=1e-4, atol=1e-3), "large-batch mismatch"

    print("KERNEL_OK")
</pallas_src>

<mosaic_0001>
module attributes {stable_mosaic.version = 11 : i64} {
  func.func @pg_forward_kernel(%arg0: memref<8x27xf32, #tpu.memory_space<vmem>>, %arg1: memref<27x27xf32, #tpu.memory_space<vmem>>, %arg2: memref<8x27xf32, #tpu.memory_space<vmem>>) attributes {dimension_semantics = [], scalar_prefetch = 0 : i64, scratch_operands = 0 : i64, tpu.core_type = #tpu.core_type<tc>} {
    %c0 = arith.constant 0 : index
    %c0_0 = arith.constant 0 : index
    %0 = vector.load %arg0[%c0, %c0_0] : memref<8x27xf32, #tpu.memory_space<vmem>>, vector<8x27xf32>
    %c0_1 = arith.constant 0 : index
    %c0_2 = arith.constant 0 : index
    %1 = vector.load %arg1[%c0_1, %c0_2] : memref<27x27xf32, #tpu.memory_space<vmem>>, vector<27x27xf32>
    %cst = arith.constant dense<0.000000e+00> : vector<8x27xf32>
    %2 = tpu.matmul %0, %1, %cst {dimension_numbers = #tpu.dot_dimension_numbers<[1], [0], [0], [1], [0, 0, 1, 1], [], []>} : vector<8x27xf32>, vector<27x27xf32>, vector<8x27xf32> -> vector<8x27xf32>
    %c0_3 = arith.constant 0 : index
    %c0_4 = arith.constant 0 : index
    %3 = vector.load %arg2[%c0_3, %c0_4] : memref<8x27xf32, #tpu.memory_space<vmem>>, vector<8x27xf32>
    tpu.vector_store %arg2[%c0_3, %c0_4], %2 {strides = array<i32>} : memref<8x27xf32, #tpu.memory_space<vmem>>, vector<8x27xf32>,
    return
  }
}

</mosaic_0001>

<llo_original>
// kernel: policy_gradient_forward_batched.1
$region0: #{policy_gradient_forward_batched.1}
  #allocation0 [shape = 'u32[]', space=smem, size = 0x4, offset = 0x4, fixed_abs, tag = 'smem constant byte address 0x4 - core index']
  #allocation1 [shape = 'u32[144,128]{1,0:T(1,128)}', space=vmem, size = 0x12000, scoped, tag = 'internal scratch']
  %s0 = inlined_call_operand.vmem [shape: f32[8,27], index: 0, kind: input, shape index: {}]
  %s1 = inlined_call_operand.hbm [shape: f32[27,27], index: 1, kind: input, shape index: {}]
  %s2 = inlined_call_operand.vmem [shape: f32[8,27], index: 2, kind: output, shape index: {}]
  %s3 = sld [smem:[#allocation0]]
  $region22: #{policy_gradient_forward_batched.1} parent=0
    _
  %s5 = ssub.s32 1, %s3
  %s6 = scalar_select 0, %s5, %s3
  $region1: #{policy_gradient_forward_batched.1} parent=0
    #allocation2 [shape = 'u8[16384]{0}', space=vmem, size = 0x4000, scoped, tag = 'input window, operand 1, single buffered']
    #allocation3 [shape = 's32[1]{0}', space=sflag, size = 0x4, scoped, tag = 'scoped memory for policy_gradient_forward_batched.1']
    %7 = vsyncpa [#allocation3], 0
    // Predicated region
    $region2: #{policy_gradient_forward_batched.1} parent=1 // pred_check
      _
    $region3: #{policy_gradient_forward_batched.1} parent=1 // pred_check_branch
      %9 = sbr.rel (0) target = $region5
    $region4: #{policy_gradient_forward_batched.1} parent=1 // pred_region
      _
    $region5: #{policy_gradient_forward_batched.1} parent=1 // pred_fallthru
      _
    // Predicated region
    $region6: #{policy_gradient_forward_batched.1} parent=1 // pred_check
      _
    $region7: #{policy_gradient_forward_batched.1} parent=1 // pred_check_branch
      %11 = sbr.rel (0) target = $region9
    $region8: #{policy_gradient_forward_batched.1} parent=1 // pred_region
      %s13 = ssub.s32 512, 512
      %14 = vsyncadd [#allocation3], %s13
      %s15 = sshll.u32 [#allocation2], 4
      %s16 = int_to_ptr.vmem [resolvable:$true] %s15
      %21 = dma.hbm_to_vmem [thread:$0]  %s1, 512, %s16, [#allocation3], 128, 128, 8
    $region9: #{policy_gradient_forward_batched.1} parent=1 // pred_fallthru
      _
    // Predicated region
    $region10: #{policy_gradient_forward_batched.1} parent=1 // pred_check
      _
    $region11: #{policy_gradient_forward_batched.1} parent=1 // pred_check_branch
      %23 = sbr.rel (0) target = $region13
    $region12: #{policy_gradient_forward_batched.1} parent=1 // pred_region
      %24 = dma.done [#allocation3], 512
    $region13: #{policy_gradient_forward_batched.1} parent=1 // pred_fallthru
      _
    %v25 = vld [vmem:[%s0] sm:$0xff]
    %v26 = vld [vmem:[#allocation2] sm:$0xff]
    %v27 = vld [vmem:[#allocation2 + $0x8] sm:$0xff]
    %v28 = vld [vmem:[#allocation2 + $0x10] sm:$0xff]
    %v29 = vld [vmem:[#allocation2 + $0x18] sm:$0x7]
    %vm30 = vcmask 220160
    %v32 = vsel %vm30, %v25, 0
    %vm34 = vcmask 1042432
    %v36 = vsel %vm34, %v29, 0
    %38 = vmatprep.subr.mxu0 0.0
    %39 = vmatpush1.msra.mxu0 %v26
    %40 = vmatprep.subr.mxu0 0.0
    %41 = vmatpush1.msra.mxu0 %v27
    %42 = vmatprep.subr.mxu0 0.0
    %43 = vmatpush1.msra.mxu0 %v28
    %44 = vmatprep.subr.mxu0 0.0
    %45 = vmatpush1.msra.mxu0 %v36
    %46 = vmatprep.subr.mxu0 0.0
    %47 = vmatpush1.msra.mxu0 0.0
    %48 = vmatprep.subr.mxu0 0.0
    %49 = vmatpush1.msra.mxu0 0.0
    %50 = vmatprep.subr.mxu0 0.0
    %51 = vmatpush1.msra.mxu0 0.0
    %52 = vmatprep.subr.mxu0 0.0
    %53 = vmatpush1.msra.mxu0 0.0
    %54 = vmatprep.subr.mxu0 0.0
    %55 = vmatpush1.msra.mxu0 0.0
    %56 = vmatprep.subr.mxu0 0.0
    %57 = vmatpush1.msra.mxu0 0.0
    %58 = vmatprep.subr.mxu0 0.0
    %59 = vmatpush1.msra.mxu0 0.0
    %60 = vmatprep.subr.mxu0 0.0
    %61 = vmatpush1.msra.mxu0 0.0
    %62 = vmatprep.subr.mxu0 0.0
    %63 = vmatpush1.msra.mxu0 0.0
    %64 = vmatprep.subr.mxu0 0.0
    %65 = vmatpush1.msra.mxu0 0.0
    %66 = vmatprep.subr.mxu0 0.0
    %67 = vmatpush1.msra.mxu0 0.0
    %68 = vmatprep.subr.mxu0 0.0
    %69 = vmatpush1.msra.mxu0 0.0
    %70 = vmatprep.subr.mxu0 0.0
    %71 = vmatpush1.msra.mxu0 0.0
    %72 = vmatprep.subr.mxu0 0.0
    %73 = vmatpush1.msra.mxu0 0.0
    %74 = vmatprep.subr.mxu0 0.0
    %75 = vmatpush1.msra.mxu0 0.0
    %76 = vmatprep.subr.mxu0 0.0
    %77 = vmatpush1.msra.mxu0 0.0
    %78 = vmatprep.subr.mxu0 0.0
    %79 = vmatpush1.msra.mxu0 0.0
    %80 = vmatprep.subr.mxu0 0.0
    %81 = vmatpush1.msra.mxu0 0.0
    %82 = vmatprep.subr.mxu0 0.0
    %83 = vmatpush1.msra.mxu0 0.0
    %84 = vmatprep.subr.mxu0 0.0
    %85 = vmatpush1.msra.mxu0 0.0
    %86 = vmatprep.subr.mxu0 0.0
    %87 = vmatpush1.msra.mxu0 0.0
    %88 = vmatprep.subr.mxu0 0.0
    %89 = vmatpush1.msra.mxu0 0.0
    %90 = vmatprep.subr.mxu0 0.0
    %91 = vmatpush1.msra.mxu0 0.0
    %92 = vmatprep.subr.mxu0 0.0
    %93 = vmatpush1.msra.mxu0 0.0
    %94 = vmatprep.subr.mxu0 0.0
    %95 = vmatpush1.msra.mxu0 0.0
    %96 = vmatprep.subr.mxu0 0.0
    %97 = vmatpush1.msra.mxu0 0.0
    %98 = vmatprep.subr.mxu0 0.0
    %99 = vmatpush1.msra.mxu0 0.0
    %100 = vmatprep.subr.mxu0 0.0
    %101 = vmatpush1.msra.mxu0 0.0
    %102 = vmatprep.mubr.f32.mxu0 0.0
    %103 = vmatmul.mubr.f32.gmra.mrb[0].mxu0 %v32
    %v104 = vpop.f32.mrb[0].mxu0
    %v105 = vadd.f32 0.0, %v104
    %v106 = vpop.f32.mrb[0].mxu0
    %107 = vdwg.mxu0
    %108 = vst.msk [vmem:[%s2] sm:$0xff] %vm30, %v105
    // Predicated region
    $region14: #{policy_gradient_forward_batched.1} parent=1 // pred_check
      _
    $region15: #{policy_gradient_forward_batched.1} parent=1 // pred_check_branch
      %110 = sbr.rel (0) target = $region17
    $region16: #{policy_gradient_forward_batched.1} parent=1 // pred_region
      _
    $region17: #{policy_gradient_forward_batched.1} parent=1 // pred_fallthru
      _
    // Predicated region
    $region18: #{policy_gradient_forward_batched.1} parent=1 // pred_check
      _
    $region19: #{policy_gradient_forward_batched.1} parent=1 // pred_check_branch
      %112 = sbr.rel (0) target = $region21
    $region20: #{policy_gradient_forward_batched.1} parent=1 // pred_region
      _
    $region21: #{policy_gradient_forward_batched.1} parent=1 // pred_fallthru
      _
    %113 = vsyncpa [#allocation3], 1

</llo_original>
